<compile_context>
chip_gen: v7x
topology: tpu7x:2x2x1
jax: 0.10.0
libtpu: 0.0.40
codegen_flags: <defaults>
</compile_context>

<pallas_src>
import jax
import jax.numpy as jnp
from jax.experimental import pallas as pl
from jax.experimental.pallas import tpu as pltpu

_LANE = 128


def _round_up(x, m):
    return (x + m - 1) // m * m


def mlp_kernel(x_ref, w1_ref, b1_ref, w2_ref, b2_ref, w3_ref, b3_ref, o_ref):
    """Fused 3-layer MLP: (Linear -> ReLU) x2 -> Linear.

    Operands may be bf16 (DMA savings); every dot accumulates in f32 on the
    MXU, and biases / ReLU run in f32 on the VPU (safe on v5e: no bf16 VALU).
    """
    cdt = w1_ref.dtype  # compute/DMA dtype (bf16 or f32)
    x = x_ref[...]

    # Layer 1: Linear + ReLU
    h1 = jnp.dot(x, w1_ref[...], preferred_element_type=jnp.float32)
    h1 = jnp.maximum(h1 + b1_ref[...], 0.0).astype(cdt)

    # Layer 2: Linear + ReLU
    h2 = jnp.dot(h1, w2_ref[...], preferred_element_type=jnp.float32)
    h2 = jnp.maximum(h2 + b2_ref[...], 0.0).astype(cdt)

    # Layer 3: Linear (logits, no activation); output block is lane-padded.
    out = jnp.dot(h2, w3_ref[...], preferred_element_type=jnp.float32) + b3_ref[...]
    o_ref[...] = out.astype(o_ref.dtype)


def neural_network_forward(x, params, *, tile_b=None, compute_dtype=jnp.bfloat16):
    """Tiles over the batch dimension; weights/biases are small and stay
    resident in VMEM (constant index_map)."""
    w1, b1, w2, b2, w3, b3 = params
    B, D_in = x.shape
    H = w1.shape[1]
    C = w3.shape[1]
    Cp = _round_up(C, _LANE)  # lane-dense output width (unmasked vst)

    # Pad the final weight/bias so the kernel writes a lane-dense output slab.
    w3p = jnp.zeros((H, Cp), w3.dtype).at[:, :C].set(w3)
    b3p = jnp.zeros((1, Cp), b3.dtype).at[:, :C].set(b3)

    # bf16 operands halve the (dominant) HBM traffic; accumulation stays f32.
    xc = x.astype(compute_dtype)
    w1c = w1.astype(compute_dtype)
    w2c = w2.astype(compute_dtype)
    w3c = w3p.astype(compute_dtype)
    b1f = b1.astype(jnp.float32)
    b2f = b2.astype(jnp.float32)
    b3f = b3p.astype(jnp.float32)

    # Batch tile: multiple of 8, capped at 256 so the fused h1/h2 live values
    # stay within vreg budget while the grid still has >1 step for pipelining
    # (and TC-sharding on v7x) when B is large.
    if tile_b is None:
        tile_b = B if B <= 256 else 256
    grid = (pl.cdiv(B, tile_b),)

    out_itemsize = jnp.dtype(x.dtype).itemsize
    flops = int(2 * B * (D_in * H + H * H + H * Cp))
    bytes_accessed = int(
        xc.size * jnp.dtype(compute_dtype).itemsize
        + B * Cp * out_itemsize
        + sum(int(a.size) * a.dtype.itemsize
              for a in (w1c, w2c, w3c, b1f, b2f, b3f))
    )

    out_padded = pl.pallas_call(
        mlp_kernel,
        out_shape=jax.ShapeDtypeStruct((B, Cp), x.dtype),
        grid_spec=pltpu.PrefetchScalarGridSpec(
            num_scalar_prefetch=0,
            grid=grid,
            in_specs=[
                pl.BlockSpec((tile_b, D_in), lambda i: (i, 0)),  # x tile
                pl.BlockSpec((D_in, H), lambda i: (0, 0)),       # w1 (resident)
                pl.BlockSpec((1, H), lambda i: (0, 0)),          # b1
                pl.BlockSpec((H, H), lambda i: (0, 0)),          # w2
                pl.BlockSpec((1, H), lambda i: (0, 0)),          # b2
                pl.BlockSpec((H, Cp), lambda i: (0, 0)),         # w3 (lane-padded)
                pl.BlockSpec((1, Cp), lambda i: (0, 0)),         # b3
            ],
            out_specs=pl.BlockSpec((tile_b, Cp), lambda i: (i, 0)),
        ),
        compiler_params=pltpu.CompilerParams(
            dimension_semantics=("parallel",),
            # Explicit, with headroom: fits comfortably even on v7x (64 MiB
            # physical / 32 MiB default scoped) and within v5e's default.
            vmem_limit_bytes=32 * 1024 * 1024,
        ),
        cost_estimate=pl.CostEstimate(
            flops=flops, transcendentals=0, bytes_accessed=bytes_accessed),
    )(xc, w1c, b1f, w2c, b2f, w3c, b3f)

    return out_padded[:, :C]


def init_params(key, input_size, hidden_size, num_classes, dtype=jnp.float32):
    """Deterministic init matching the PyTorch module's parameter shapes.
    PyTorch Linear weight is (out, in); we store the transpose (in, out)."""
    k = jax.random.split(key, 6)

    def uniform_init(kk, shape, fan_in):
        bound = 1.0 / jnp.sqrt(fan_in)
        return jax.random.uniform(kk, shape, dtype, -bound, bound)

    w1 = uniform_init(k[0], (input_size, hidden_size), input_size)
    b1 = uniform_init(k[1], (1, hidden_size), input_size)
    w2 = uniform_init(k[2], (hidden_size, hidden_size), hidden_size)
    b2 = uniform_init(k[3], (1, hidden_size), hidden_size)
    w3 = uniform_init(k[4], (hidden_size, num_classes), hidden_size)
    b3 = uniform_init(k[5], (1, num_classes), hidden_size)
    return (w1, b1, w2, b2, w3, b3)


def reference_forward(x, params, compute_dtype=jnp.bfloat16):
    """Plain-JAX reference mirroring the kernel numerics exactly:
    bf16 matmul operands, f32 accumulation, f32 bias/ReLU."""
    w1, b1, w2, b2, w3, b3 = params

    def dot32(a, b):
        return jnp.dot(a.astype(compute_dtype), b.astype(compute_dtype),
                       preferred_element_type=jnp.float32)

    h = jnp.maximum(dot32(x, w1) + b1.astype(jnp.float32), 0.0)
    h = jnp.maximum(dot32(h, w2) + b2.astype(jnp.float32), 0.0)
    return dot32(h, w3) + b3.astype(jnp.float32)


if __name__ == "__main__":
    batch = 8
    input_size = 64
    hidden_size = 32
    num_classes = 10

    key = jax.random.PRNGKey(0)
    kx, kp = jax.random.split(key)
    x = jax.random.normal(kx, (batch, input_size), dtype=jnp.float32)
    params = init_params(kp, input_size, hidden_size, num_classes)

    out = neural_network_forward(x, params)
    out = jax.block_until_ready(out)

    ref = reference_forward(x, params)
    assert out.shape == (batch, num_classes)
    assert jnp.allclose(out, ref, atol=1e-3, rtol=1e-3), float(
        jnp.max(jnp.abs(out - ref)))

    print("KERNEL_OK")
</pallas_src>

<mosaic_0001>
module attributes {stable_mosaic.version = 11 : i64} {
  func.func @mlp_kernel(%arg0: i32, %arg1: memref<8x64xbf16, #tpu.memory_space<vmem>>, %arg2: memref<64x32xbf16, #tpu.memory_space<vmem>>, %arg3: memref<1x32xf32, #tpu.memory_space<vmem>>, %arg4: memref<32x32xbf16, #tpu.memory_space<vmem>>, %arg5: memref<1x32xf32, #tpu.memory_space<vmem>>, %arg6: memref<32x128xbf16, #tpu.memory_space<vmem>>, %arg7: memref<1x128xf32, #tpu.memory_space<vmem>>, %arg8: memref<8x128xf32, #tpu.memory_space<vmem>>) attributes {dimension_semantics = [#tpu.dimension_semantics<parallel>], iteration_bounds = array<i64: 1>, scalar_prefetch = 0 : i64, scratch_operands = 0 : i64, tpu.core_type = #tpu.core_type<tc>, window_params = [{transform_indices = @transform_0, window_bounds = array<i64: 8, 64>}, {pipeline_mode = #tpu.pipeline_mode<synchronous>, transform_indices = @transform_1, window_bounds = array<i64: 64, 32>}, {pipeline_mode = #tpu.pipeline_mode<synchronous>, transform_indices = @transform_2, window_bounds = array<i64: 1, 32>}, {pipeline_mode = #tpu.pipeline_mode<synchronous>, transform_indices = @transform_3, window_bounds = array<i64: 32, 32>}, {pipeline_mode = #tpu.pipeline_mode<synchronous>, transform_indices = @transform_4, window_bounds = array<i64: 1, 32>}, {pipeline_mode = #tpu.pipeline_mode<synchronous>, transform_indices = @transform_5, window_bounds = array<i64: 32, 128>}, {pipeline_mode = #tpu.pipeline_mode<synchronous>, transform_indices = @transform_6, window_bounds = array<i64: 1, 128>}, {transform_indices = @transform_7, window_bounds = array<i64: 8, 128>}]} {
    %c0 = arith.constant 0 : index
    %c0_0 = arith.constant 0 : index
    %0 = vector.load %arg1[%c0, %c0_0] : memref<8x64xbf16, #tpu.memory_space<vmem>>, vector<8x64xbf16>
    %c0_1 = arith.constant 0 : index
    %c0_2 = arith.constant 0 : index
    %1 = vector.load %arg2[%c0_1, %c0_2] : memref<64x32xbf16, #tpu.memory_space<vmem>>, vector<64x32xbf16>
    %cst = arith.constant dense<0.000000e+00> : vector<8x32xf32>
    %2 = tpu.matmul %0, %1, %cst {dimension_numbers = #tpu.dot_dimension_numbers<[1], [0], [0], [1], [0, 0, 1, 1], [], []>} : vector<8x64xbf16>, vector<64x32xbf16>, vector<8x32xf32> -> vector<8x32xf32>
    %c0_3 = arith.constant 0 : index
    %c0_4 = arith.constant 0 : index
    %3 = vector.load %arg3[%c0_3, %c0_4] : memref<1x32xf32, #tpu.memory_space<vmem>>, vector<1x32xf32>
    %4 = vector.broadcast %3 : vector<1x32xf32> to vector<8x32xf32>
    %5 = arith.addf %2, %4 : vector<8x32xf32>
    %cst_5 = arith.constant 0.000000e+00 : f32
    %6 = vector.broadcast %cst_5 : f32 to vector<8x32xf32>
    %7 = arith.maximumf %5, %6 : vector<8x32xf32>
    %8 = arith.truncf %7 : vector<8x32xf32> to vector<8x32xbf16>
    %c0_6 = arith.constant 0 : index
    %c0_7 = arith.constant 0 : index
    %9 = vector.load %arg4[%c0_6, %c0_7] : memref<32x32xbf16, #tpu.memory_space<vmem>>, vector<32x32xbf16>
    %cst_8 = arith.constant dense<0.000000e+00> : vector<8x32xf32>
    %10 = tpu.matmul %8, %9, %cst_8 {dimension_numbers = #tpu.dot_dimension_numbers<[1], [0], [0], [1], [0, 0, 1, 1], [], []>} : vector<8x32xbf16>, vector<32x32xbf16>, vector<8x32xf32> -> vector<8x32xf32>
    %c0_9 = arith.constant 0 : index
    %c0_10 = arith.constant 0 : index
    %11 = vector.load %arg5[%c0_9, %c0_10] : memref<1x32xf32, #tpu.memory_space<vmem>>, vector<1x32xf32>
    %12 = vector.broadcast %11 : vector<1x32xf32> to vector<8x32xf32>
    %13 = arith.addf %10, %12 : vector<8x32xf32>
    %cst_11 = arith.constant 0.000000e+00 : f32
    %14 = vector.broadcast %cst_11 : f32 to vector<8x32xf32>
    %15 = arith.maximumf %13, %14 : vector<8x32xf32>
    %16 = arith.truncf %15 : vector<8x32xf32> to vector<8x32xbf16>
    %c0_12 = arith.constant 0 : index
    %c0_13 = arith.constant 0 : index
    %17 = vector.load %arg6[%c0_12, %c0_13] : memref<32x128xbf16, #tpu.memory_space<vmem>>, vector<32x128xbf16>
    %cst_14 = arith.constant dense<0.000000e+00> : vector<8x128xf32>
    %18 = tpu.matmul %16, %17, %cst_14 {dimension_numbers = #tpu.dot_dimension_numbers<[1], [0], [0], [1], [0, 0, 1, 1], [], []>} : vector<8x32xbf16>, vector<32x128xbf16>, vector<8x128xf32> -> vector<8x128xf32>
    %c0_15 = arith.constant 0 : index
    %c0_16 = arith.constant 0 : index
    %19 = vector.load %arg7[%c0_15, %c0_16] : memref<1x128xf32, #tpu.memory_space<vmem>>, vector<1x128xf32>
    %20 = vector.broadcast %19 : vector<1x128xf32> to vector<8x128xf32>
    %21 = arith.addf %18, %20 : vector<8x128xf32>
    %c0_17 = arith.constant 0 : index
    %c0_18 = arith.constant 0 : index
    %22 = vector.load %arg8[%c0_17, %c0_18] : memref<8x128xf32, #tpu.memory_space<vmem>>, vector<8x128xf32>
    tpu.vector_store %arg8[%c0_17, %c0_18], %21 {strides = array<i32>} : memref<8x128xf32, #tpu.memory_space<vmem>>, vector<8x128xf32>,
    return
  }
  func.func @transform_0(%arg0: i32) -> (i32, i32) {
    %c0_i32 = arith.constant 0 : i32
    %c0_i32_0 = arith.constant 0 : i32
    return %arg0, %c0_i32 : i32, i32
  }
  func.func @transform_1(%arg0: i32) -> (i32, i32) {
    %c0_i32 = arith.constant 0 : i32
    %c0_i32_0 = arith.constant 0 : i32
    %c0_i32_1 = arith.constant 0 : i32
    return %c0_i32, %c0_i32_0 : i32, i32
  }
  func.func @transform_2(%arg0: i32) -> (i32, i32) {
    %c0_i32 = arith.constant 0 : i32
    %c0_i32_0 = arith.constant 0 : i32
    %c0_i32_1 = arith.constant 0 : i32
    return %c0_i32, %c0_i32_0 : i32, i32
  }
  func.func @transform_3(%arg0: i32) -> (i32, i32) {
    %c0_i32 = arith.constant 0 : i32
    %c0_i32_0 = arith.constant 0 : i32
    %c0_i32_1 = arith.constant 0 : i32
    return %c0_i32, %c0_i32_0 : i32, i32
  }
  func.func @transform_4(%arg0: i32) -> (i32, i32) {
    %c0_i32 = arith.constant 0 : i32
    %c0_i32_0 = arith.constant 0 : i32
    %c0_i32_1 = arith.constant 0 : i32
    return %c0_i32, %c0_i32_0 : i32, i32
  }
  func.func @transform_5(%arg0: i32) -> (i32, i32) {
    %c0_i32 = arith.constant 0 : i32
    %c0_i32_0 = arith.constant 0 : i32
    %c0_i32_1 = arith.constant 0 : i32
    return %c0_i32, %c0_i32_0 : i32, i32
  }
  func.func @transform_6(%arg0: i32) -> (i32, i32) {
    %c0_i32 = arith.constant 0 : i32
    %c0_i32_0 = arith.constant 0 : i32
    %c0_i32_1 = arith.constant 0 : i32
    return %c0_i32, %c0_i32_0 : i32, i32
  }
  func.func @transform_7(%arg0: i32) -> (i32, i32) {
    %c0_i32 = arith.constant 0 : i32
    %c0_i32_0 = arith.constant 0 : i32
    return %arg0, %c0_i32 : i32, i32
  }
}

</mosaic_0001>

<llo_original>
// kernel: tpu_custom_call.1
$region0: #{tpu_custom_call.1}
  #allocation0 [shape = 'u32[]', space=smem, size = 0x4, offset = 0x4, fixed_abs, tag = 'smem constant byte address 0x4 - core index']
  #allocation1 [shape = 'u32[144,128]{1,0:T(1,128)}', space=vmem, size = 0x12000, scoped, tag = 'internal scratch']
  %s0 = inlined_call_operand.vmem [shape: bf16[8,64], index: 0, kind: input, shape index: {}]
  %s1 = inlined_call_operand.vmem [shape: bf16[64,32], index: 1, kind: input, shape index: {}]
  %s2 = inlined_call_operand.vmem [shape: f32[1,32], index: 2, kind: input, shape index: {}]
  %s3 = inlined_call_operand.vmem [shape: bf16[32,32], index: 3, kind: input, shape index: {}]
  %s4 = inlined_call_operand.vmem [shape: f32[1,32], index: 4, kind: input, shape index: {}]
  %s5 = inlined_call_operand.vmem [shape: bf16[32,128], index: 5, kind: input, shape index: {}]
  %s6 = inlined_call_operand.vmem [shape: f32[1,128], index: 6, kind: input, shape index: {}]
  %s7 = inlined_call_operand.hbm [shape: f32[8,128], index: 7, kind: output, shape index: {}]
  %s8 = sld [smem:[#allocation0]]
  $region38: #{tpu_custom_call.1} parent=0
    _
  %s10 = ssub.s32 1, %s8
  %s11 = scalar_select 0, %s10, %s8
  $region1: #{tpu_custom_call.1} parent=0
    #allocation2 [shape = 'u8[4096]{0}', space=vmem, size = 0x1000, scoped, tag = 'output window, operand 0, single buffered']
    #allocation3 [shape = 's32[1]{0}', space=sflag, size = 0x4, scoped, tag = 'scoped memory for tpu_custom_call.1']
    %12 = vsyncpa [#allocation3], 0
    // Predicated region
    $region2: #{tpu_custom_call.1} parent=1 // pred_check
      _
    $region3: #{tpu_custom_call.1} parent=1 // pred_check_branch
      %14 = sbr.rel (0) target = $region5
    $region4: #{tpu_custom_call.1} parent=1 // pred_region
      _
    $region5: #{tpu_custom_call.1} parent=1 // pred_fallthru
      _
    // Predicated region
    $region6: #{tpu_custom_call.1} parent=1 // pred_check
      _
    $region7: #{tpu_custom_call.1} parent=1 // pred_check_branch
      %16 = sbr.rel (0) target = $region9
    $region8: #{tpu_custom_call.1} parent=1 // pred_region
      _
    $region9: #{tpu_custom_call.1} parent=1 // pred_fallthru
      _
    // Predicated region
    $region10: #{tpu_custom_call.1} parent=1 // pred_check
      _
    $region11: #{tpu_custom_call.1} parent=1 // pred_check_branch
      %18 = sbr.rel (0) target = $region13
    $region12: #{tpu_custom_call.1} parent=1 // pred_region
      _
    $region13: #{tpu_custom_call.1} parent=1 // pred_fallthru
      _
    // Predicated region
    $region14: #{tpu_custom_call.1} parent=1 // pred_check
      _
    $region15: #{tpu_custom_call.1} parent=1 // pred_check_branch
      %20 = sbr.rel (0) target = $region17
    $region16: #{tpu_custom_call.1} parent=1 // pred_region
      _
    $region17: #{tpu_custom_call.1} parent=1 // pred_fallthru
      _
    // Predicated region
    $region18: #{tpu_custom_call.1} parent=1 // pred_check
      _
    $region19: #{tpu_custom_call.1} parent=1 // pred_check_branch
      %22 = sbr.rel (0) target = $region21
    $region20: #{tpu_custom_call.1} parent=1 // pred_region
      _
    $region21: #{tpu_custom_call.1} parent=1 // pred_fallthru
      _
    // Predicated region
    $region22: #{tpu_custom_call.1} parent=1 // pred_check
      _
    $region23: #{tpu_custom_call.1} parent=1 // pred_check_branch
      %24 = sbr.rel (0) target = $region25
    $region24: #{tpu_custom_call.1} parent=1 // pred_region
      _
    $region25: #{tpu_custom_call.1} parent=1 // pred_fallthru
      _
    // Predicated region
    $region26: #{tpu_custom_call.1} parent=1 // pred_check
      _
    $region27: #{tpu_custom_call.1} parent=1 // pred_check_branch
      %26 = sbr.rel (0) target = $region29
    $region28: #{tpu_custom_call.1} parent=1 // pred_region
      _
    $region29: #{tpu_custom_call.1} parent=1 // pred_fallthru
      _
    %v28 = vld [vmem:[%s0] sm:$0xf]
    %v29 = vld [vmem:[%s1] sm:$0xf]
    %v30 = vld [vmem:[%s1 + $0x4] sm:$0xf]
    %v31 = vld [vmem:[%s1 + $0x8] sm:$0xf]
    %v32 = vld [vmem:[%s1 + $0xc] sm:$0xf]
    %v33 = vld [vmem:[%s1 + $0x10] sm:$0xf]
    %v34 = vld [vmem:[%s1 + $0x14] sm:$0xf]
    %v35 = vld [vmem:[%s1 + $0x18] sm:$0xf]
    %v36 = vld [vmem:[%s1 + $0x1c] sm:$0xf]
    %v37 = vld [vmem:[%s2] sm:$0x1]
    %v39 = vlaneseq
    %v40 = vshrl.u32 %v39, 7
    %v41 = vsub.s32 0, %v40
    %v42 = vrot.slane %v37, %v41
    %v52 = vunpack.c.l.b16 %v29
    %v53 = vunpack.c.l.b16 %v30
    %v54 = vunpack.c.l.b16 %v31
    %v55 = vunpack.c.l.b16 %v32
    %v56 = vunpack.c.l.b16 %v33
    %v57 = vunpack.c.l.b16 %v34
    %v58 = vunpack.c.l.b16 %v35
    %v59 = vunpack.c.l.b16 %v36
    %v60 = vpack.c.b16 %v53, %v52
    %v61 = vpack.c.b16 %v55, %v54
    %v62 = vpack.c.b16 %v57, %v56
    %v63 = vpack.c.b16 %v59, %v58
    %vm68 = vcmask 523264
    %v70 = vsel %vm68, %v28, 0
    %72 = vmatprep.subr.bf16.mxu0 0
    %73 = vmatpush1.bf16.msra.mxu0 %v60
    %74 = vmatprep.subr.bf16.mxu0 0
    %75 = vmatpush1.bf16.msra.mxu0 %v61
    %76 = vmatprep.subr.bf16.mxu0 0
    %77 = vmatpush1.bf16.msra.mxu0 %v62
    %78 = vmatprep.subr.bf16.mxu0 0
    %79 = vmatpush1.bf16.msra.mxu0 %v63
    %80 = vmatprep.subr.bf16.mxu0 0
    %81 = vmatpush1.bf16.msra.mxu0 0
    %82 = vmatprep.subr.bf16.mxu0 0
    %83 = vmatpush1.bf16.msra.mxu0 0
    %84 = vmatprep.subr.bf16.mxu0 0
    %85 = vmatpush1.bf16.msra.mxu0 0
    %86 = vmatprep.subr.bf16.mxu0 0
    %87 = vmatpush1.bf16.msra.mxu0 0
    %88 = vmatprep.subr.bf16.mxu0 0
    %89 = vmatpush1.bf16.msra.mxu0 0
    %90 = vmatprep.subr.bf16.mxu0 0
    %91 = vmatpush1.bf16.msra.mxu0 0
    %92 = vmatprep.subr.bf16.mxu0 0
    %93 = vmatpush1.bf16.msra.mxu0 0
    %94 = vmatprep.subr.bf16.mxu0 0
    %95 = vmatpush1.bf16.msra.mxu0 0
    %96 = vmatprep.subr.bf16.mxu0 0
    %97 = vmatpush1.bf16.msra.mxu0 0
    %98 = vmatprep.subr.bf16.mxu0 0
    %99 = vmatpush1.bf16.msra.mxu0 0
    %100 = vmatprep.subr.bf16.mxu0 0
    %101 = vmatpush1.bf16.msra.mxu0 0
    %102 = vmatprep.subr.bf16.mxu0 0
    %103 = vmatpush1.bf16.msra.mxu0 0
    %104 = vmatprep.mubr.bf16.mxu0 0
    %105 = vmatmul.mubr.bf16.gmra.mrb[0].mxu0 %v70
    %v106 = vpop.f32.mrb[0].mxu0
    %v107 = vadd.f32 %v42, %v106
    %v108 = vpop.f32.mrb[0].mxu0
    %v109 = vpop.f32.mrb[0].mxu0
    %v110 = vpop.f32.mrb[0].mxu0
    %111 = vdwg.mxu0
    %v112 = vmax.f32 %v107, 0.0
    %v113 = vpack.c.bf16 %v112, %v112
    %v114 = vld [vmem:[%s3] sm:$0xf]
    %v115 = vld [vmem:[%s3 + $0x4] sm:$0xf]
    %v116 = vld [vmem:[%s3 + $0x8] sm:$0xf]
    %v117 = vld [vmem:[%s3 + $0xc] sm:$0xf]
    %v118 = vld [vmem:[%s4] sm:$0x1]
    %v120 = vlaneseq
    %v121 = vshrl.u32 %v120, 7
    %v122 = vsub.s32 0, %v121
    %v123 = vrot.slane %v118, %v122
    %v129 = vunpack.c.l.b16 %v114
    %v130 = vunpack.c.l.b16 %v115
    %v131 = vunpack.c.l.b16 %v116
    %v132 = vunpack.c.l.b16 %v117
    %v133 = vpack.c.b16 %v130, %v129
    %v134 = vpack.c.b16 %v132, %v131
    %vm137 = vcmask 261120
    %v139 = vsel %vm137, %v113, 0
    %141 = vmatprep.subr.bf16.mxu0 0
    %142 = vmatpush1.bf16.msra.mxu0 %v133
    %143 = vmatprep.subr.bf16.mxu0 0
    %144 = vmatpush1.bf16.msra.mxu0 %v134
    %145 = vmatprep.subr.bf16.mxu0 0
    %146 = vmatpush1.bf16.msra.mxu0 0
    %147 = vmatprep.subr.bf16.mxu0 0
    %148 = vmatpush1.bf16.msra.mxu0 0
    %149 = vmatprep.subr.bf16.mxu0 0
    %150 = vmatpush1.bf16.msra.mxu0 0
    %151 = vmatprep.subr.bf16.mxu0 0
    %152 = vmatpush1.bf16.msra.mxu0 0
    %153 = vmatprep.subr.bf16.mxu0 0
    %154 = vmatpush1.bf16.msra.mxu0 0
    %155 = vmatprep.subr.bf16.mxu0 0
    %156 = vmatpush1.bf16.msra.mxu0 0
    %157 = vmatprep.subr.bf16.mxu0 0
    %158 = vmatpush1.bf16.msra.mxu0 0
    %159 = vmatprep.subr.bf16.mxu0 0
    %160 = vmatpush1.bf16.msra.mxu0 0
    %161 = vmatprep.subr.bf16.mxu0 0
    %162 = vmatpush1.bf16.msra.mxu0 0
    %163 = vmatprep.subr.bf16.mxu0 0
    %164 = vmatpush1.bf16.msra.mxu0 0
    %165 = vmatprep.subr.bf16.mxu0 0
    %166 = vmatpush1.bf16.msra.mxu0 0
    %167 = vmatprep.subr.bf16.mxu0 0
    %168 = vmatpush1.bf16.msra.mxu0 0
    %169 = vmatprep.subr.bf16.mxu0 0
    %170 = vmatpush1.bf16.msra.mxu0 0
    %171 = vmatprep.subr.bf16.mxu0 0
    %172 = vmatpush1.bf16.msra.mxu0 0
    %173 = vmatprep.mubr.bf16.mxu0 0
    %174 = vmatmul.mubr.bf16.gmra.mrb[0].mxu0 %v139
    %v175 = vpop.f32.mrb[0].mxu0
    %v176 = vadd.f32 %v123, %v175
    %v177 = vpop.f32.mrb[0].mxu0
    %v178 = vpop.f32.mrb[0].mxu0
    %v179 = vpop.f32.mrb[0].mxu0
    %180 = vdwg.mxu0
    %v181 = vmax.f32 %v176, 0.0
    %v182 = vpack.c.bf16 %v181, %v181
    %v183 = vld [vmem:[%s5] sm:$0xf]
    %v184 = vld [vmem:[%s5 + $0x4] sm:$0xf]
    %v185 = vld [vmem:[%s5 + $0x8] sm:$0xf]
    %v186 = vld [vmem:[%s5 + $0xc] sm:$0xf]
    %v187 = vld [vmem:[%s6] sm:$0x1]
    %v189 = vlaneseq
    %v190 = vshrl.u32 %v189, 7
    %v191 = vsub.s32 0, %v190
    %v192 = vrot.slane %v187, %v191
    %v198 = vunpack.c.l.b16 %v183
    %v199 = vunpack.c.l.b16 %v184
    %v200 = vunpack.c.l.b16 %v185
    %v201 = vunpack.c.l.b16 %v186
    %v202 = vpack.c.b16 %v199, %v198
    %v203 = vpack.c.b16 %v201, %v200
    %v207 = vsel %vm137, %v182, 0
    %209 = vmatprep.subr.bf16.mxu0 0
    %210 = vmatpush1.bf16.msra.mxu0 %v202
    %211 = vmatprep.subr.bf16.mxu0 0
    %212 = vmatpush1.bf16.msra.mxu0 %v203
    %213 = vmatprep.subr.bf16.mxu0 0
    %214 = vmatpush1.bf16.msra.mxu0 0
    %215 = vmatprep.subr.bf16.mxu0 0
    %216 = vmatpush1.bf16.msra.mxu0 0
    %217 = vmatprep.subr.bf16.mxu0 0
    %218 = vmatpush1.bf16.msra.mxu0 0
    %219 = vmatprep.subr.bf16.mxu0 0
    %220 = vmatpush1.bf16.msra.mxu0 0
    %221 = vmatprep.subr.bf16.mxu0 0
    %222 = vmatpush1.bf16.msra.mxu0 0
    %223 = vmatprep.subr.bf16.mxu0 0
    %224 = vmatpush1.bf16.msra.mxu0 0
    %225 = vmatprep.subr.bf16.mxu0 0
    %226 = vmatpush1.bf16.msra.mxu0 0
    %227 = vmatprep.subr.bf16.mxu0 0
    %228 = vmatpush1.bf16.msra.mxu0 0
    %229 = vmatprep.subr.bf16.mxu0 0
    %230 = vmatpush1.bf16.msra.mxu0 0
    %231 = vmatprep.subr.bf16.mxu0 0
    %232 = vmatpush1.bf16.msra.mxu0 0
    %233 = vmatprep.subr.bf16.mxu0 0
    %234 = vmatpush1.bf16.msra.mxu0 0
    %235 = vmatprep.subr.bf16.mxu0 0
    %236 = vmatpush1.bf16.msra.mxu0 0
    %237 = vmatprep.subr.bf16.mxu0 0
    %238 = vmatpush1.bf16.msra.mxu0 0
    %239 = vmatprep.subr.bf16.mxu0 0
    %240 = vmatpush1.bf16.msra.mxu0 0
    %241 = vmatprep.mubr.bf16.mxu0 0
    %242 = vmatmul.mubr.bf16.gmra.mrb[0].mxu0 %v207
    %v243 = vpop.f32.mrb[0].mxu0
    %v244 = vadd.f32 %v192, %v243
    %v245 = vpop.f32.mrb[0].mxu0
    %v246 = vpop.f32.mrb[0].mxu0
    %v247 = vpop.f32.mrb[0].mxu0
    %248 = vdwg.mxu0
    %249 = vst [vmem:[#allocation2] sm:$0xff] %v244
    // Predicated region
    $region30: #{tpu_custom_call.1} parent=1 // pred_check
      _
    $region31: #{tpu_custom_call.1} parent=1 // pred_check_branch
      %251 = sbr.rel (0) target = $region33
    $region32: #{tpu_custom_call.1} parent=1 // pred_region
      %s253 = ssub.s32 128, 128
      %254 = vsyncadd [#allocation3], %s253
      %s256 = sshll.u32 [#allocation2], 4
      %s257 = int_to_ptr.vmem [resolvable:$true] %s256
      %259 = dma.vmem_to_hbm [thread:$0]  %s257, 128, %s7, [#allocation3]
    $region33: #{tpu_custom_call.1} parent=1 // pred_fallthru
      _
    // Predicated region
    $region34: #{tpu_custom_call.1} parent=1 // pred_check
      _
    $region35: #{tpu_custom_call.1} parent=1 // pred_check_branch
      %261 = sbr.rel (0) target = $region37
    $region36: #{tpu_custom_call.1} parent=1 // pred_region
      %262 = dma.done [#allocation3], 128
    $region37: #{tpu_custom_call.1} parent=1 // pred_fallthru
      _
    %263 = vsyncpa [#allocation3], 1

</llo_original>
